<compile_context>
chip_gen: v7x
topology: tpu7x:2x2x1
jax: 0.10.0
libtpu: 0.0.40
codegen_flags: <defaults>
</compile_context>

<pallas_src>
import math
from functools import partial

import jax
import jax.numpy as jnp
from jax.experimental import pallas as pl
from jax.experimental.pallas import tpu as pltpu


# ~4 MiB x/out blocks: big enough that the ~0.35 us per-grid-step overhead is negligible
# even on v7x's faster HBM, small enough that the worst-case double-buffered footprint
# (x, out, pe tiles -> 3 arrays x 2 buffers x 4 MiB = 24 MiB) fits the explicit 40 MiB
# scoped-VMEM limit below on every generation (v5e/v6e: 128 MiB physical, v7x: 64 MiB).
_TARGET_BLOCK_BYTES = 4 * 1024 * 1024
_VMEM_LIMIT_BYTES = 40 * 1024 * 1024
# Keep the whole PE table VMEM-resident (single DMA for the entire grid) when it is
# at most this big.
_PE_RESIDENT_MAX_BYTES = 4 * 1024 * 1024


def make_positional_encodings(dim: int, max_seq_len: int,
                              dtype=jnp.float32) -> jnp.ndarray:
    """Deterministic buffer setup, identical math to the PyTorch __init__.

    Build this in the activation dtype at init (dtype=x.dtype) so the forward pass
    never pays a per-call cast.
    """
    position = jnp.arange(0, max_seq_len, dtype=jnp.float32)[:, None]          # (L, 1)
    div_term = jnp.exp(
        jnp.arange(0, dim, 2, dtype=jnp.float32) * -(math.log(10000.0) / dim)  # (ceil(D/2),)
    )
    angles = position * div_term                                               # (L, ceil(D/2))
    enc = jnp.zeros((max_seq_len, dim), dtype=jnp.float32)
    enc = enc.at[:, 0::2].set(jnp.sin(angles))
    # Guard odd dims: cos part only fills floor(dim/2) columns.
    enc = enc.at[:, 1::2].set(jnp.cos(angles)[:, : dim // 2])
    return enc.astype(dtype)


def _add_kernel(x_ref, pe_ref, o_ref):
    # Plain elementwise add.  The cast is a no-op when PE was built in x.dtype.
    o_ref[...] = (x_ref[...] + pe_ref[...]).astype(o_ref.dtype)


def _add_resident_pe_kernel(x_ref, pe_ref, o_ref, *, ts):
    # PE table is fully VMEM-resident (constant index_map); select this seq tile's rows
    # with a dynamic slice.  off + ts never exceeds the resident block's row count.
    off = pl.multiple_of(pl.program_id(0) * ts, ts)
    o_ref[...] = (x_ref[...] + pe_ref[pl.ds(off, ts), :]).astype(o_ref.dtype)


def _sublane_multiple(dtype) -> int:
    # Packed sublane tile: 8 rows for 32-bit, 16 for bf16, 32 for int8.
    return 8 * max(1, 4 // jnp.dtype(dtype).itemsize)


def _compiler_params():
    return pltpu.CompilerParams(
        dimension_semantics=("parallel", "parallel"),
        vmem_limit_bytes=_VMEM_LIMIT_BYTES,
    )


def _cost(B, S, D, x_itemsize, pe_itemsize):
    return pl.CostEstimate(
        flops=B * S * D,
        transcendentals=0,
        bytes_accessed=2 * B * S * D * x_itemsize + S * D * pe_itemsize,
    )


def _forward_seq_tiled(x: jnp.ndarray, encodings: jnp.ndarray) -> jnp.ndarray:
    """Tile the sequence axis.  Lane-dense when D % 128 == 0; otherwise the full
    (unaligned) D is the block's last dim (masked stores, still correct and
    VMEM-bounded)."""
    B, S, D = x.shape
    L = encodings.shape[0]
    x_item = jnp.dtype(x.dtype).itemsize
    pe_item = jnp.dtype(encodings.dtype).itemsize
    # Sublane quantum that is legal for both the x and PE array dtypes.
    sub = max(_sublane_multiple(x.dtype), _sublane_multiple(encodings.dtype))

    if S < sub:
        # Tiny-sequence corner: one full-extent tile.  Slice PE to exactly (S, D) so
        # both blocks fall under the "full array dims" exemption of the (8, 128) rule
        # (the slice copies only a few hundred bytes).
        pe = encodings[:S, :]
        ts, num_s_tiles, resident = S, 1, False
    else:
        pe = encodings  # full table; no per-call slice / cast
        ts = _TARGET_BLOCK_BYTES // max(1, D * x_item)
        ts = max(sub, (ts // sub) * sub)
        ts = min(ts, (S // sub) * sub)      # sublane multiple, <= S
        num_s_tiles = pl.cdiv(S, ts)
        pe_rows = num_s_tiles * ts
        # PE fully resident iff it is small and the padded row span exists in the table
        # (so the in-kernel dynamic slice never leaves the resident block).
        resident = (pe_rows <= L) and (pe_rows * D * pe_item <= _PE_RESIDENT_MAX_BYTES)

    if resident:
        kernel = partial(_add_resident_pe_kernel, ts=ts)
        pe_spec = pl.BlockSpec((num_s_tiles * ts, D), lambda s, b: (0, 0))
    else:
        kernel = _add_kernel
        # NOTE: when the full table is passed (L >= S), a partial last seq tile may read
        # PE rows >= S; those rows only pair with x rows that are masked on the output
        # store, so this is harmless.
        pe_spec = pl.BlockSpec((ts, D), lambda s, b: (s, 0))

    return pl.pallas_call(
        kernel,
        out_shape=jax.ShapeDtypeStruct((B, S, D), x.dtype),
        grid_spec=pltpu.PrefetchScalarGridSpec(
            num_scalar_prefetch=0,
            # Seq tiles outermost: PE block index only changes there, so PE is DMA'd
            # ~once per seq tile (not once per (b, s) pair), and the leading "parallel"
            # axis gives v7x an even 2-TC split even when B == 1.  Batch innermost.
            grid=(num_s_tiles, B),
            in_specs=[
                pl.BlockSpec((None, ts, D), lambda s, b: (b, s, 0)),
                pe_spec,
            ],
            out_specs=pl.BlockSpec((None, ts, D), lambda s, b: (b, s, 0)),
        ),
        compiler_params=_compiler_params(),
        cost_estimate=_cost(B, S, D, x_item, pe_item),
    )(x, pe)


def _forward_flat(x: jnp.ndarray, encodings: jnp.ndarray) -> jnp.ndarray:
    """D not lane-aligned but S*D is: flatten (S, D) into one lane axis so every store
    is a full unmasked vst."""
    B, S, D = x.shape
    N = S * D
    x_item = jnp.dtype(x.dtype).itemsize
    pe_item = jnp.dtype(encodings.dtype).itemsize
    sub = _sublane_multiple(x.dtype)

    x2 = x.reshape(B, N)
    pe2 = encodings[:S, :].reshape(1, N)   # fallback path: small one-off copy

    tb = B if B < sub else sub             # multiple of 8, or the full batch dim
    tn = _TARGET_BLOCK_BYTES // max(1, tb * x_item)
    tn = max(128, (tn // 128) * 128)
    tn = min(tn, N)                        # N is 128-aligned here

    grid = (pl.cdiv(N, tn), pl.cdiv(B, tb))   # lane tiles outer, batch inner
    out = pl.pallas_call(
        _add_kernel,
        out_shape=jax.ShapeDtypeStruct((B, N), x.dtype),
        grid_spec=pltpu.PrefetchScalarGridSpec(
            num_scalar_prefetch=0,
            grid=grid,
            in_specs=[
                pl.BlockSpec((tb, tn), lambda ni, bi: (bi, ni)),
                pl.BlockSpec((1, tn), lambda ni, bi: (0, ni)),
            ],
            out_specs=pl.BlockSpec((tb, tn), lambda ni, bi: (bi, ni)),
        ),
        compiler_params=_compiler_params(),
        cost_estimate=_cost(B, S, D, x_item, pe_item),
    )(x2, pe2)
    return out.reshape(B, S, D)


def positional_encoding_forward(x: jnp.ndarray, encodings: jnp.ndarray) -> jnp.ndarray:
    """x: (B, S, D); encodings: (max_seq_len, D). Returns x + encodings[:S] (broadcast
    over batch), matching PositionalEncoding.forward."""
    B, S, D = x.shape
    if encodings.shape[0] < S:
        raise ValueError(
            "Positional encodings length is shorter than input sequence length."
        )
    if D % 128 == 0:
        return _forward_seq_tiled(x, encodings)
    if (S * D) % 128 == 0:
        return _forward_flat(x, encodings)
    # TODO(synk): when neither D nor S*D is 128-aligned, consider flattening to
    # (1, B*S*D) (with PE broadcast over batch) or padding D to a 128 multiple instead
    # of taking masked stores in the seq-tiled fallback below.
    return _forward_seq_tiled(x, encodings)


if __name__ == "__main__":
    key = jax.random.PRNGKey(0)
    k1, k2, k3 = jax.random.split(key, 3)

    # Case 1: non-lane-aligned D with 128-aligned S*D -> flattened lane-dense path.
    B, S, D, L = 2, 8, 32, 16
    x1 = jax.random.normal(k1, (B, S, D), dtype=jnp.float32)
    enc1 = make_positional_encodings(dim=D, max_seq_len=L, dtype=x1.dtype)
    out1 = jax.block_until_ready(positional_encoding_forward(x1, enc1))
    ref1 = x1 + enc1[:S, :][None, :, :]
    assert out1.shape == (B, S, D)
    assert jnp.allclose(out1, ref1, atol=1e-6, rtol=1e-6)

    # Case 2: lane-aligned D, small PE -> seq-tiled path with VMEM-resident PE.
    B2, S2, D2, L2 = 2, 16, 128, 32
    x2 = jax.random.normal(k2, (B2, S2, D2), dtype=jnp.float32)
    enc2 = make_positional_encodings(dim=D2, max_seq_len=L2, dtype=x2.dtype)
    out2 = jax.block_until_ready(positional_encoding_forward(x2, enc2))
    ref2 = x2 + enc2[:S2, :][None, :, :]
    assert out2.shape == (B2, S2, D2)
    assert jnp.allclose(out2, ref2, atol=1e-6, rtol=1e-6)

    # Case 3: lane-aligned D with S not a tile multiple and L == S -> seq-tiled path
    # with per-tile PE blocks (non-resident) and a masked partial last tile.
    B3, S3, D3, L3 = 2, 20, 128, 20
    x3 = jax.random.normal(k3, (B3, S3, D3), dtype=jnp.float32)
    enc3 = make_positional_encodings(dim=D3, max_seq_len=L3, dtype=x3.dtype)
    out3 = jax.block_until_ready(positional_encoding_forward(x3, enc3))
    ref3 = x3 + enc3[:S3, :][None, :, :]
    assert out3.shape == (B3, S3, D3)
    assert jnp.allclose(out3, ref3, atol=1e-6, rtol=1e-6)

    print("KERNEL_OK")
</pallas_src>

<mosaic_0001>
module attributes {stable_mosaic.version = 11 : i64} {
  func.func @_add_kernel(%arg0: i32, %arg1: i32, %arg2: memref<2x256xf32, #tpu.memory_space<vmem>>, %arg3: memref<1x256xf32, #tpu.memory_space<vmem>>, %arg4: memref<2x256xf32, #tpu.memory_space<vmem>>) attributes {dimension_semantics = [#tpu.dimension_semantics<parallel>, #tpu.dimension_semantics<parallel>], iteration_bounds = array<i64: 1, 1>, scalar_prefetch = 0 : i64, scratch_operands = 0 : i64, tpu.core_type = #tpu.core_type<tc>, window_params = [{transform_indices = @transform_0, window_bounds = array<i64: 2, 256>}, {transform_indices = @transform_1, window_bounds = array<i64: 1, 256>}, {transform_indices = @transform_2, window_bounds = array<i64: 2, 256>}]} {
    %c0 = arith.constant 0 : index
    %c0_0 = arith.constant 0 : index
    %0 = vector.load %arg2[%c0, %c0_0] : memref<2x256xf32, #tpu.memory_space<vmem>>, vector<2x256xf32>
    %c0_1 = arith.constant 0 : index
    %c0_2 = arith.constant 0 : index
    %1 = vector.load %arg3[%c0_1, %c0_2] : memref<1x256xf32, #tpu.memory_space<vmem>>, vector<1x256xf32>
    %2 = vector.broadcast %1 : vector<1x256xf32> to vector<2x256xf32>
    %3 = arith.addf %0, %2 : vector<2x256xf32>
    %c0_3 = arith.constant 0 : index
    %c0_4 = arith.constant 0 : index
    %4 = vector.load %arg4[%c0_3, %c0_4] : memref<2x256xf32, #tpu.memory_space<vmem>>, vector<2x256xf32>
    tpu.vector_store %arg4[%c0_3, %c0_4], %3 {strides = array<i32>} : memref<2x256xf32, #tpu.memory_space<vmem>>, vector<2x256xf32>,
    return
  }
  func.func @transform_0(%arg0: i32, %arg1: i32) -> (i32, i32) {
    %c0_i32 = arith.constant 0 : i32
    return %arg1, %arg0 : i32, i32
  }
  func.func @transform_1(%arg0: i32, %arg1: i32) -> (i32, i32) {
    %c0_i32 = arith.constant 0 : i32
    %c0_i32_0 = arith.constant 0 : i32
    return %c0_i32, %arg0 : i32, i32
  }
  func.func @transform_2(%arg0: i32, %arg1: i32) -> (i32, i32) {
    %c0_i32 = arith.constant 0 : i32
    return %arg1, %arg0 : i32, i32
  }
}

</mosaic_0001>

<llo_original>
// kernel: tpu_custom_call.1
$region0: #{tpu_custom_call.1}
  #allocation0 [shape = 'u32[]', space=smem, size = 0x4, offset = 0x4, fixed_abs, tag = 'smem constant byte address 0x4 - core index']
  #allocation1 [shape = 'u32[144,128]{1,0:T(1,128)}', space=vmem, size = 0x12000, scoped, tag = 'internal scratch']
  %s0 = inlined_call_operand.hbm [shape: f32[2,256], index: 0, kind: input, shape index: {}]
  %s1 = inlined_call_operand.vmem [shape: f32[1,256], index: 1, kind: input, shape index: {}]
  %s2 = inlined_call_operand.hbm [shape: f32[2,256], index: 2, kind: output, shape index: {}]
  %s3 = sld [smem:[#allocation0]]
  $region22: #{tpu_custom_call.1} parent=0
    _
  %s5 = ssub.s32 1, %s3
  %s6 = scalar_select 0, %s5, %s3
  $region1: #{tpu_custom_call.1} parent=0
    #allocation2 [shape = 'u8[2048]{0}', space=vmem, size = 0x800, scoped, tag = 'input window, operand 0, single buffered']
    #allocation3 [shape = 's32[1]{0}', space=sflag, size = 0x4, scoped, tag = 'scoped memory for tpu_custom_call.1']
    #allocation4 [shape = 's32[1]{0}', space=sflag, size = 0x4, scoped, tag = 'scoped memory for tpu_custom_call.1']
    #allocation5 [shape = 'u8[2048]{0}', space=vmem, size = 0x800, scoped, tag = 'output window, operand 0, single buffered']
    %7 = vsyncpa [#allocation3], 0
    %8 = vsyncpa [#allocation4], 0
    // Predicated region
    $region2: #{tpu_custom_call.1} parent=1 // pred_check
      _
    $region3: #{tpu_custom_call.1} parent=1 // pred_check_branch
      %10 = sbr.rel (0) target = $region5
    $region4: #{tpu_custom_call.1} parent=1 // pred_region
      %s12 = ssub.s32 64, 64
      %13 = vsyncadd [#allocation3], %s12
      %s15 = sshll.u32 [#allocation2], 4
      %s16 = int_to_ptr.vmem [resolvable:$true] %s15
      %18 = dma.hbm_to_vmem [thread:$0]  %s0, 64, %s16, [#allocation3]
    $region5: #{tpu_custom_call.1} parent=1 // pred_fallthru
      _
    // Predicated region
    $region6: #{tpu_custom_call.1} parent=1 // pred_check
      _
    $region7: #{tpu_custom_call.1} parent=1 // pred_check_branch
      %20 = sbr.rel (0) target = $region9
    $region8: #{tpu_custom_call.1} parent=1 // pred_region
      _
    $region9: #{tpu_custom_call.1} parent=1 // pred_fallthru
      _
    // Predicated region
    $region10: #{tpu_custom_call.1} parent=1 // pred_check
      _
    $region11: #{tpu_custom_call.1} parent=1 // pred_check_branch
      %22 = sbr.rel (0) target = $region13
    $region12: #{tpu_custom_call.1} parent=1 // pred_region
      %23 = dma.done [#allocation3], 64
    $region13: #{tpu_custom_call.1} parent=1 // pred_fallthru
      _
    %v24 = vld [vmem:[#allocation2] sm:$0xf]
    %v25 = vld [vmem:[%s1] sm:$0x3]
    %v27 = vlaneseq
    %v28 = vshrl.u32 %v27, 7
    %v29 = vsub.s32 0, %v28
    %v30 = vrot.slane %v25, %v29
    %v31 = vlaneseq
    %v32 = vshrl.u32 %v31, 7
    %v33 = vsub.s32 1, %v32
    %v34 = vrot.slane %v25, %v33
    %v35 = vcombine.low %v30, %v34
    %v37 = vunpack.c.l.s4 1983009808
    %v38 = vunpack.c.0.s8 %v37
    %v39 = vlaneseq
    %v40 = vshrl.u32 %v39, 7
    %v41 = vsub.s32 %v38, %v40
    %v42 = vrot.slane %v35, %v41
    %v44 = vadd.f32 %v24, %v42
    %45 = vst [vmem:[#allocation5] sm:$0xf] %v44
    // Predicated region
    $region14: #{tpu_custom_call.1} parent=1 // pred_check
      _
    $region15: #{tpu_custom_call.1} parent=1 // pred_check_branch
      %47 = sbr.rel (0) target = $region17
    $region16: #{tpu_custom_call.1} parent=1 // pred_region
      %s49 = ssub.s32 64, 64
      %50 = vsyncadd [#allocation4], %s49
      %s52 = sshll.u32 [#allocation5], 4
      %s53 = int_to_ptr.vmem [resolvable:$true] %s52
      %55 = dma.vmem_to_hbm [thread:$0]  %s53, 64, %s2, [#allocation4]
    $region17: #{tpu_custom_call.1} parent=1 // pred_fallthru
      _
    // Predicated region
    $region18: #{tpu_custom_call.1} parent=1 // pred_check
      _
    $region19: #{tpu_custom_call.1} parent=1 // pred_check_branch
      %57 = sbr.rel (0) target = $region21
    $region20: #{tpu_custom_call.1} parent=1 // pred_region
      %58 = dma.done [#allocation4], 64
    $region21: #{tpu_custom_call.1} parent=1 // pred_fallthru
      _
    %59 = vsyncpa [#allocation3], 1
    %60 = vsyncpa [#allocation4], 1

</llo_original>
